<compile_context>
chip_gen: v5e
topology: v5e:2x2
jax: 0.10.0
libtpu: 0.0.40
codegen_flags: <defaults>
</compile_context>

<pallas_src>
import functools
import math

import jax
import jax.numpy as jnp
from jax.experimental import pallas as pl
from jax.experimental.pallas import tpu as pltpu


def _cdiv(a, b):
    return -(-a // b)


def _vmem_capacity_bytes():
    try:
        info = pltpu.get_tpu_info()
        cap = getattr(info, "vmem_capacity_bytes", None)
        if cap:
            return int(cap)
    except Exception:
        pass
    return 64 * 1024 * 1024  # conservative fallback (v7x per-TC VMEM)


# ----------------------------------------------------------------------------
# Pallas kernel: KGE score functions, feature-major layout.
#   h_ref: (1, D, nh)    nh in {1, tn}
#   r_ref: (1, D, nr)    (RotatE relation is the precomputed cos||sin operand)
#   t_ref: (1, D, nt)
#   o_ref: (1, 1, 1, tn) lane-dense row of scores
# ----------------------------------------------------------------------------
def _score_kernel(h_ref, r_ref, t_ref, o_ref, *, model_name, margin):
    h = h_ref[0].astype(jnp.float32)   # (D, nh)
    r = r_ref[0].astype(jnp.float32)   # (D, nr)
    t = t_ref[0].astype(jnp.float32)   # (D, nt)

    # NOTE: only the 'tail-batch' ordering of the original score functions is
    # implemented.  For TransE/DistMult/ComplEx it is algebraically identical
    # to the 'head-batch' branch; for RotatE the 'head-batch' branch conjugates
    # the relation, which is equivalent ONLY because RotatE relations are
    # unit-modulus phases.  The MorsE mode strings ('single', 'head_predict',
    # 'tail_predict', 'rel-batch') never hit the literal 'head-batch' branch.
    if model_name == "TransE":
        s = (h + r) - t
        score = margin - jnp.sum(jnp.abs(s), axis=0, keepdims=True)

    elif model_name == "DistMult":
        score = jnp.sum((h * r) * t, axis=0, keepdims=True)

    elif model_name == "ComplEx":
        d = h.shape[0] // 2
        # Splits are along the sublane (feature) axis; keep D/2 a multiple of 8
        # so they are tile-aligned (true for all realistic KGE dims).
        re_h, im_h = h[:d, :], h[d:, :]
        re_r, im_r = r[:d, :], r[d:, :]
        re_t, im_t = t[:d, :], t[d:, :]
        re_s = re_h * re_r - im_h * im_r
        im_s = re_h * im_r + im_h * re_r
        score = jnp.sum(re_s * re_t + im_s * im_t, axis=0, keepdims=True)

    elif model_name == "RotatE":
        d = h.shape[0] // 2
        re_h, im_h = h[:d, :], h[d:, :]
        re_t, im_t = t[:d, :], t[d:, :]
        re_r, im_r = r[:d, :], r[d:, :]   # cos / sin, precomputed in wrapper
        re_s = re_h * re_r - im_h * im_r - re_t
        im_s = re_h * im_r + im_h * re_r - im_t
        norm = jnp.sqrt(re_s * re_s + im_s * im_s)
        score = margin - jnp.sum(norm, axis=0, keepdims=True)
    else:
        raise ValueError("model %s not supported" % model_name)

    o_ref[0, 0, :, :] = score.astype(o_ref.dtype)


# ----------------------------------------------------------------------------
# Wrapper: feature-major transpose, candidate tiling, broadcast-via-index_map
# ----------------------------------------------------------------------------
def _pallas_score_fm(head, relation, tail, *, model_name, margin, tile_cols=None):
    """head/relation/tail batch-major (Bo, No, Do), Bo in {1,B}, No in {1,N}.

    All three operands must share the same feature width D (the RotatE relation
    must already be the cos||sin operand).  Returns (B, N) float32 scores.
    """
    ops = [head, relation, tail]
    B = max(op.shape[0] for op in ops)
    N = max(op.shape[1] for op in ops)
    D = head.shape[2]

    if relation.shape[2] != D or tail.shape[2] != D:
        raise ValueError("all operands must share the entity embedding width")
    if model_name in ("ComplEx", "RotatE") and D % 2 != 0:
        raise ValueError("ComplEx/RotatE expect an even entity dim")
    for op in ops:
        if op.shape[0] not in (1, B) or op.shape[1] not in (1, N):
            raise ValueError("operand shape %s not broadcastable to (B=%d, N=%d)"
                             % (op.shape, B, N))

    # Feature-major layout: (Bo, Do, No) -> candidates live on the lane axis.
    ops_fm = [jnp.swapaxes(op, 1, 2) for op in ops]

    # ---- candidate tile size from a generation-aware VMEM budget ------------
    vmem_cap = _vmem_capacity_bytes()
    budget = int(0.35 * vmem_cap)
    in_col_bytes = sum(op.shape[1] * op.dtype.itemsize
                       for op in ops_fm if op.shape[2] == N)
    # per-column: ~3x buffered inputs + f32 temporaries for ComplEx/RotatE.
    col_bytes = max(1, 3 * in_col_bytes + 8 * D * 4)
    max_tn = min(8192, max(128, (budget // col_bytes) // 128 * 128))
    if tile_cols is not None:
        max_tn = min(max_tn, max(128, (int(tile_cols) // 128) * 128))
    if N <= max_tn:
        tn, NT = N, 1                    # single tile, block == full candidate dim
    else:
        tn, NT = max_tn, _cdiv(N, max_tn)  # 128-multiple tiles, ragged last tile

    # ---- BlockSpecs over grid (candidate-tile, batch) -----------------------
    def make_idx(varies_b, varies_n):
        def idx(n, b):
            return ((b if varies_b else 0), 0, (n if varies_n else 0))
        return idx

    in_specs, block_ns = [], []
    for op in ops_fm:
        varies_b = op.shape[0] != 1
        varies_n = op.shape[2] != 1
        block_n = tn if varies_n else 1
        block_ns.append(block_n)
        in_specs.append(pl.BlockSpec((1, op.shape[1], block_n),
                                     make_idx(varies_b, varies_n)))

    out_shape = jax.ShapeDtypeStruct((B, NT, 1, tn), jnp.float32)
    out_spec = pl.BlockSpec((1, 1, 1, tn), lambda n, b: (b, n, 0, 0))

    # ---- VMEM limit & cost estimate (advisory) -------------------------------
    vmem_need = 2 * tn * 4                              # output double buffer
    for op, bn in zip(ops_fm, block_ns):
        vmem_need += 2 * op.shape[1] * bn * op.dtype.itemsize
    vmem_need += 8 * D * tn * 4                         # f32 temporaries headroom
    vmem_limit = int(min(max(2 * vmem_need, 32 << 20),
                         max(vmem_cap - (8 << 20), 32 << 20)))

    bytes_accessed = B * NT * tn * 4
    for op, bn in zip(ops_fm, block_ns):
        fetches = NT * (B if op.shape[0] != 1 else 1)   # resident across b otherwise
        bytes_accessed += fetches * op.shape[1] * bn * op.dtype.itemsize
    flops = 8 * B * NT * tn * D
    transcendentals = B * NT * tn * (D // 2) if model_name == "RotatE" else 0
    cost = pl.CostEstimate(flops=int(flops), transcendentals=int(transcendentals),
                           bytes_accessed=int(bytes_accessed))

    kernel = functools.partial(_score_kernel, model_name=model_name,
                               margin=float(margin))

    out = pl.pallas_call(
        kernel,
        out_shape=out_shape,
        grid_spec=pltpu.PrefetchScalarGridSpec(
            num_scalar_prefetch=0,
            grid=(NT, B),
            in_specs=in_specs,
            out_specs=out_spec,
        ),
        compiler_params=pltpu.CompilerParams(
            dimension_semantics=("parallel", "arbitrary"),
            vmem_limit_bytes=vmem_limit,
        ),
        cost_estimate=cost,
    )(*ops_fm)

    return out.reshape(B, NT * tn)[:, :N]


def pallas_score(head, relation, tail, *, model_name, mode, margin, emb_range,
                 tile_cols=None):
    """head/tail: (B?, N?, D), relation: (B?, N?, RD); returns (B, N) scores."""
    del mode  # only the tail-batch ordering is needed for MorsE's mode strings
    if model_name == "RotatE":
        if relation.shape[-1] * 2 != head.shape[-1]:
            raise ValueError("RotatE expects rel_dim == ent_dim // 2")
        # Hoist the EUP cos/sin out of the kernel: build the cos||sin operand
        # once per call on the (small) gathered relation rows / relation table.
        phase = relation.astype(jnp.float32) / (emb_range / math.pi)
        relation = jnp.concatenate([jnp.cos(phase), jnp.sin(phase)], axis=-1)

    B = max(head.shape[0], relation.shape[0], tail.shape[0])
    N = max(head.shape[1], relation.shape[1], tail.shape[1])
    if N == 1 and B > 1:
        # 'single' mode: fold the batch onto the candidate (lane) axis so the
        # kernel gets one wide lane-dense tile instead of B one-column steps.
        head = jnp.swapaxes(head, 0, 1)
        relation = jnp.swapaxes(relation, 0, 1)
        tail = jnp.swapaxes(tail, 0, 1)
        out = _pallas_score_fm(head, relation, tail, model_name=model_name,
                               margin=margin, tile_cols=tile_cols)
        return out.reshape(B, 1)
    return _pallas_score_fm(head, relation, tail, model_name=model_name,
                            margin=margin, tile_cols=tile_cols)


# ----------------------------------------------------------------------------
# KGEModel: gathers in plain JAX, score in the Pallas kernel
# ----------------------------------------------------------------------------
class KGEModelPallas:
    def __init__(self, kge_model, num_rel, emb_dim, rel_dim, margin, key,
                 param_dtype=jnp.float32):
        if kge_model not in ["TransE", "DistMult", "ComplEx", "RotatE"]:
            raise ValueError("model %s not supported" % kge_model)
        self.model_name = kge_model
        self.emb_dim = emb_dim
        self.epsilon = 2.0
        self.margin = float(margin)
        self.embedding_range = (self.margin + self.epsilon) / emb_dim
        rel = jax.random.uniform(
            key, (num_rel, rel_dim), jnp.float32,
            minval=-self.embedding_range, maxval=self.embedding_range)
        # bf16 tables halve HBM bytes for the memory-bound kernel; the kernel
        # upcasts to f32 internally.
        self.relation_embedding = rel.astype(param_dtype)

    def forward(self, sample, ent_emb, mode="single"):
        rel_emb = self.relation_embedding
        if mode == "single":
            head = jnp.take(ent_emb, sample[:, 0], axis=0)[:, None, :]
            relation = jnp.take(rel_emb, sample[:, 1], axis=0)[:, None, :]
            tail = jnp.take(ent_emb, sample[:, 2], axis=0)[:, None, :]
        elif mode == "head_predict":
            tail_part, head_part = sample
            relation = jnp.take(rel_emb, tail_part[:, 1], axis=0)[:, None, :]
            tail = jnp.take(ent_emb, tail_part[:, 2], axis=0)[:, None, :]
            if head_part is None:
                head = ent_emb[None, :, :]            # score against all entities
            else:
                bs, nss = head_part.shape
                head = jnp.take(ent_emb, head_part.reshape(-1), axis=0).reshape(bs, nss, -1)
        elif mode == "tail_predict":
            head_part, tail_part = sample
            head = jnp.take(ent_emb, head_part[:, 0], axis=0)[:, None, :]
            relation = jnp.take(rel_emb, head_part[:, 1], axis=0)[:, None, :]
            if tail_part is None:
                tail = ent_emb[None, :, :]            # score against all entities
            else:
                bs, nss = tail_part.shape
                tail = jnp.take(ent_emb, tail_part.reshape(-1), axis=0).reshape(bs, nss, -1)
        elif mode == "rel-batch":
            head_part, tail_part = sample
            head = jnp.take(ent_emb, head_part[:, 0], axis=0)[:, None, :]
            tail = jnp.take(ent_emb, head_part[:, 2], axis=0)[:, None, :]
            if tail_part is None:
                relation = rel_emb[None, :, :]        # score against all relations
            else:
                bs, nss = tail_part.shape
                relation = jnp.take(rel_emb, tail_part.reshape(-1), axis=0).reshape(bs, nss, -1)
        else:
            raise ValueError("mode %s not supported" % mode)

        return pallas_score(head, relation, tail,
                            model_name=self.model_name, mode=mode,
                            margin=self.margin, emb_range=self.embedding_range)


# ----------------------------------------------------------------------------
# Pure-JAX reference (mirrors the PyTorch score functions) for verification
# ----------------------------------------------------------------------------
def reference_score(head, relation, tail, *, model_name, margin, emb_range):
    h = head.astype(jnp.float32)
    r = relation.astype(jnp.float32)
    t = tail.astype(jnp.float32)
    if model_name == "TransE":
        return margin - jnp.sum(jnp.abs((h + r) - t), axis=2)
    if model_name == "DistMult":
        return jnp.sum((h * r) * t, axis=2)
    if model_name == "ComplEx":
        re_h, im_h = jnp.split(h, 2, axis=2)
        re_r, im_r = jnp.split(r, 2, axis=2)
        re_t, im_t = jnp.split(t, 2, axis=2)
        re_s = re_h * re_r - im_h * im_r
        im_s = re_h * im_r + im_h * re_r
        return jnp.sum(re_s * re_t + im_s * im_t, axis=2)
    if model_name == "RotatE":
        re_h, im_h = jnp.split(h, 2, axis=2)
        re_t, im_t = jnp.split(t, 2, axis=2)
        phase = r / (emb_range / math.pi)
        re_r, im_r = jnp.cos(phase), jnp.sin(phase)
        re_s = re_h * re_r - im_h * im_r - re_t
        im_s = re_h * im_r + im_h * re_r - im_t
        return margin - jnp.sum(jnp.sqrt(re_s ** 2 + im_s ** 2), axis=2)
    raise ValueError(model_name)


if __name__ == "__main__":
    key = jax.random.PRNGKey(0)
    k_ent, k_rel, k_s, k_t, k_tb = jax.random.split(key, 5)

    num_ent, num_rel = 10, 5
    emb_dim = 32          # entity embedding width handed to the kernel (ent_dim)
    margin = 12.0
    B, NEG, NEG_BIG = 2, 16, 200

    ent_emb = jax.random.normal(k_ent, (num_ent, emb_dim), jnp.float32)
    pos = jnp.stack([
        jax.random.randint(k_s, (B,), 0, num_ent),
        jax.random.randint(jax.random.fold_in(k_s, 1), (B,), 0, num_rel),
        jax.random.randint(jax.random.fold_in(k_s, 2), (B,), 0, num_ent),
    ], axis=1).astype(jnp.int32)
    neg_tails = jax.random.randint(k_t, (B, NEG), 0, num_ent).astype(jnp.int32)
    neg_tails_big = jax.random.randint(k_tb, (B, NEG_BIG), 0, num_ent).astype(jnp.int32)

    ok = True
    for model_name in ["TransE", "DistMult", "ComplEx", "RotatE"]:
        rel_dim = emb_dim // 2 if model_name == "RotatE" else emb_dim
        model = KGEModelPallas(model_name, num_rel, emb_dim, rel_dim, margin, k_rel)
        emb_rng = model.embedding_range

        h = jnp.take(ent_emb, pos[:, 0], axis=0)[:, None, :]
        r = jnp.take(model.relation_embedding, pos[:, 1], axis=0)[:, None, :]
        t = jnp.take(ent_emb, pos[:, 2], axis=0)[:, None, :]

        # ---- 'single' mode ----
        score = model.forward(pos, ent_emb, mode="single")
        jax.block_until_ready(score)
        ref = reference_score(h, r, t, model_name=model_name,
                              margin=margin, emb_range=emb_rng)
        ok &= bool(jnp.allclose(score, ref, atol=1e-4, rtol=1e-4))

        # ---- 'tail_predict' mode (negative tail batch) ----
        score_n = model.forward((pos, neg_tails), ent_emb, mode="tail_predict")
        jax.block_until_ready(score_n)
        t_n = jnp.take(ent_emb, neg_tails.reshape(-1), axis=0).reshape(B, NEG, -1)
        ref_n = reference_score(h, r, t_n, model_name=model_name,
                                margin=margin, emb_range=emb_rng)
        ok &= bool(jnp.allclose(score_n, ref_n, atol=1e-4, rtol=1e-4))

        # ---- 'head_predict' against ALL entities (cand == 'all') ----
        score_all = model.forward((pos, None), ent_emb, mode="head_predict")
        jax.block_until_ready(score_all)
        ref_all = reference_score(ent_emb[None, :, :], r, t, model_name=model_name,
                                  margin=margin, emb_range=emb_rng)
        ok &= bool(jnp.allclose(score_all, ref_all, atol=1e-4, rtol=1e-4))

        # ---- forced multi-tile + ragged-edge path (tn=128, NT=2, N=200) ----
        t_b = jnp.take(ent_emb, neg_tails_big.reshape(-1), axis=0).reshape(B, NEG_BIG, -1)
        ref_mt = reference_score(h, r, t_b, model_name=model_name,
                                 margin=margin, emb_range=emb_rng)
        score_mt = pallas_score(h, r, t_b, model_name=model_name,
                                mode="tail_predict", margin=margin,
                                emb_range=emb_rng, tile_cols=128)
        jax.block_until_ready(score_mt)
        ok &= bool(jnp.allclose(score_mt, ref_mt, atol=1e-4, rtol=1e-4))

    # ---- bf16 embedding tables (kernel upcasts to f32 internally) ----
    ent_emb_bf = ent_emb.astype(jnp.bfloat16)
    model_bf = KGEModelPallas("TransE", num_rel, emb_dim, emb_dim, margin, k_rel,
                              param_dtype=jnp.bfloat16)
    score_bf = model_bf.forward((pos, neg_tails), ent_emb_bf, mode="tail_predict")
    jax.block_until_ready(score_bf)
    h_bf = jnp.take(ent_emb_bf, pos[:, 0], axis=0)[:, None, :]
    r_bf = jnp.take(model_bf.relation_embedding, pos[:, 1], axis=0)[:, None, :]
    t_bf = jnp.take(ent_emb_bf, neg_tails.reshape(-1), axis=0).reshape(B, NEG, -1)
    ref_bf = reference_score(h_bf, r_bf, t_bf, model_name="TransE",
                             margin=margin, emb_range=model_bf.embedding_range)
    ok &= bool(jnp.allclose(score_bf, ref_bf, atol=1e-3, rtol=1e-3))

    if ok:
        print("KERNEL_OK")
    else:
        print("MISMATCH")
</pallas_src>

<mosaic_0001>
module attributes {stable_mosaic.version = 11 : i64} {
  func.func @_score_kernel(%arg0: i32, %arg1: i32, %arg2: memref<1x32x2xf32, #tpu.memory_space<vmem>>, %arg3: memref<1x32x2xf32, #tpu.memory_space<vmem>>, %arg4: memref<1x32x2xf32, #tpu.memory_space<vmem>>, %arg5: memref<1x1x1x2xf32, #tpu.memory_space<vmem>>) attributes {dimension_semantics = [#tpu.dimension_semantics<parallel>, #tpu.dimension_semantics<arbitrary>], iteration_bounds = array<i64: 1, 1>, scalar_prefetch = 0 : i64, scratch_operands = 0 : i64, tpu.core_type = #tpu.core_type<tc>, window_params = [{transform_indices = @transform_0, window_bounds = array<i64: 1, 32, 2>}, {transform_indices = @transform_1, window_bounds = array<i64: 1, 32, 2>}, {transform_indices = @transform_2, window_bounds = array<i64: 1, 32, 2>}, {transform_indices = @transform_3, window_bounds = array<i64: 1, 1, 1, 2>}]} {
    %c0 = arith.constant 0 : index
    %c0_0 = arith.constant 0 : index
    %c0_1 = arith.constant 0 : index
    %0 = vector.load %arg2[%c0, %c0_0, %c0_1] : memref<1x32x2xf32, #tpu.memory_space<vmem>>, vector<1x32x2xf32>
    %1 = vector.shape_cast %0 : vector<1x32x2xf32> to vector<32x2xf32>
    %c0_2 = arith.constant 0 : index
    %c0_3 = arith.constant 0 : index
    %c0_4 = arith.constant 0 : index
    %2 = vector.load %arg3[%c0_2, %c0_3, %c0_4] : memref<1x32x2xf32, #tpu.memory_space<vmem>>, vector<1x32x2xf32>
    %3 = vector.shape_cast %2 : vector<1x32x2xf32> to vector<32x2xf32>
    %c0_5 = arith.constant 0 : index
    %c0_6 = arith.constant 0 : index
    %c0_7 = arith.constant 0 : index
    %4 = vector.load %arg4[%c0_5, %c0_6, %c0_7] : memref<1x32x2xf32, #tpu.memory_space<vmem>>, vector<1x32x2xf32>
    %5 = vector.shape_cast %4 : vector<1x32x2xf32> to vector<32x2xf32>
    %6 = arith.addf %1, %3 : vector<32x2xf32>
    %7 = arith.subf %6, %5 : vector<32x2xf32>
    %8 = math.absf %7 : vector<32x2xf32>
    %cst = arith.constant dense<0.000000e+00> : vector<2xf32>
    %9 = vector.multi_reduction <add>, %8, %cst [0] : vector<32x2xf32> to vector<2xf32>
    %10 = vector.shape_cast %9 : vector<2xf32> to vector<1x2xf32>
    %cst_8 = arith.constant 1.200000e+01 : f32
    %11 = vector.broadcast %cst_8 : f32 to vector<1x2xf32>
    %12 = arith.subf %11, %10 : vector<1x2xf32>
    %c0_9 = arith.constant 0 : index
    %c0_10 = arith.constant 0 : index
    %c0_11 = arith.constant 0 : index
    %c0_12 = arith.constant 0 : index
    %13 = vector.load %arg5[%c0_9, %c0_10, %c0_11, %c0_12] : memref<1x1x1x2xf32, #tpu.memory_space<vmem>>, vector<1x1x1x2xf32>
    %14 = vector.shape_cast %13 : vector<1x1x1x2xf32> to vector<1x2xf32>
    %15 = vector.shape_cast %12 : vector<1x2xf32> to vector<1x1x1x2xf32>
    tpu.vector_store %arg5[%c0_9, %c0_10, %c0_11, %c0_12], %15 {strides = array<i32>} : memref<1x1x1x2xf32, #tpu.memory_space<vmem>>, vector<1x1x1x2xf32>,
    return
  }
  func.func @transform_0(%arg0: i32, %arg1: i32) -> (i32, i32, i32) {
    %c0_i32 = arith.constant 0 : i32
    %c0_i32_0 = arith.constant 0 : i32
    %c0_i32_1 = arith.constant 0 : i32
    return %c0_i32, %c0_i32_0, %arg0 : i32, i32, i32
  }
  func.func @transform_1(%arg0: i32, %arg1: i32) -> (i32, i32, i32) {
    %c0_i32 = arith.constant 0 : i32
    %c0_i32_0 = arith.constant 0 : i32
    %c0_i32_1 = arith.constant 0 : i32
    return %c0_i32, %c0_i32_0, %arg0 : i32, i32, i32
  }
  func.func @transform_2(%arg0: i32, %arg1: i32) -> (i32, i32, i32) {
    %c0_i32 = arith.constant 0 : i32
    %c0_i32_0 = arith.constant 0 : i32
    %c0_i32_1 = arith.constant 0 : i32
    return %c0_i32, %c0_i32_0, %arg0 : i32, i32, i32
  }
  func.func @transform_3(%arg0: i32, %arg1: i32) -> (i32, i32, i32, i32) {
    %c0_i32 = arith.constant 0 : i32
    %c0_i32_0 = arith.constant 0 : i32
    %c0_i32_1 = arith.constant 0 : i32
    return %arg1, %arg0, %c0_i32, %c0_i32_0 : i32, i32, i32, i32
  }
}

</mosaic_0001>

<llo_original>
// kernel: tpu_custom_call.1
$region0: #{tpu_custom_call.1}
  #allocation0 [shape = 'u32[]', space=smem, size = 0x4, offset = 0x4, fixed_abs, tag = 'smem constant byte address 0x4 - core index']
  #allocation1 [shape = 'u32[72,128]{1,0:T(1,128)}', space=vmem, size = 0x9000, scoped, tag = 'internal scratch']
  %s0 = inlined_call_operand.vmem [shape: f32[1,32,2], index: 0, kind: input, shape index: {}]
  %s1 = inlined_call_operand.vmem [shape: f32[1,32,2], index: 1, kind: input, shape index: {}]
  %s2 = inlined_call_operand.vmem [shape: f32[1,32,2], index: 2, kind: input, shape index: {}]
  %s3 = inlined_call_operand.hbm [shape: f32[1,1,1,2], index: 3, kind: output, shape index: {}]
  %s4 = sld [smem:[#allocation0]]
  $region22: #{tpu_custom_call.1} parent=0
    _
  %s6 = ssub.s32 1, %s4
  %s7 = scalar_select 0, %s6, %s4
  $region1: #{tpu_custom_call.1} parent=0
    #allocation2 [shape = 'u8[512]{0}', space=vmem, size = 0x400, scoped, tag = 'output window, operand 0, single buffered']
    #allocation3 [shape = 's32[1]{0}', space=sflag, size = 0x4, scoped, tag = 'scoped memory for tpu_custom_call.1']
    %8 = vsyncpa [#allocation3], 0
    // Predicated region
    $region2: #{tpu_custom_call.1} parent=1 // pred_check
      _
    $region3: #{tpu_custom_call.1} parent=1 // pred_check_branch
      %10 = sbr.rel (0) target = $region5
    $region4: #{tpu_custom_call.1} parent=1 // pred_region
      _
    $region5: #{tpu_custom_call.1} parent=1 // pred_fallthru
      _
    // Predicated region
    $region6: #{tpu_custom_call.1} parent=1 // pred_check
      _
    $region7: #{tpu_custom_call.1} parent=1 // pred_check_branch
      %12 = sbr.rel (0) target = $region9
    $region8: #{tpu_custom_call.1} parent=1 // pred_region
      _
    $region9: #{tpu_custom_call.1} parent=1 // pred_fallthru
      _
    // Predicated region
    $region10: #{tpu_custom_call.1} parent=1 // pred_check
      _
    $region11: #{tpu_custom_call.1} parent=1 // pred_check_branch
      %14 = sbr.rel (0) target = $region13
    $region12: #{tpu_custom_call.1} parent=1 // pred_region
      _
    $region13: #{tpu_custom_call.1} parent=1 // pred_fallthru
      _
    %v15 = vld [vmem:[%s0] sm:$0xff]
    %v16 = vld [vmem:[%s0 + $0x8] sm:$0xff]
    %v17 = vld [vmem:[%s0 + $0x10] sm:$0xff]
    %v18 = vld [vmem:[%s0 + $0x18] sm:$0xff]
    %v19 = vld [vmem:[%s1] sm:$0xff]
    %v20 = vld [vmem:[%s1 + $0x8] sm:$0xff]
    %v21 = vld [vmem:[%s1 + $0x10] sm:$0xff]
    %v22 = vld [vmem:[%s1 + $0x18] sm:$0xff]
    %v23 = vld [vmem:[%s2] sm:$0xff]
    %v24 = vld [vmem:[%s2 + $0x8] sm:$0xff]
    %v25 = vld [vmem:[%s2 + $0x10] sm:$0xff]
    %v26 = vld [vmem:[%s2 + $0x18] sm:$0xff]
    %v27 = vadd.f32 %v15, %v19
    %v28 = vadd.f32 %v16, %v20
    %v29 = vadd.f32 %v17, %v21
    %v30 = vadd.f32 %v18, %v22
    %v31 = vsub.f32 %v27, %v23
    %v32 = vsub.f32 %v28, %v24
    %v33 = vsub.f32 %v29, %v25
    %v34 = vsub.f32 %v30, %v26
    %v35 = vand.u32 2147483647, %v31
    %v36 = vand.u32 2147483647, %v32
    %v37 = vand.u32 2147483647, %v33
    %v38 = vand.u32 2147483647, %v34
    %vm39 = vcmask 15360
    %v40 = vsel %vm39, %v35, 0.0
    %v41 = vsel %vm39, %v36, 0.0
    %v42 = vadd.f32 %v40, %v41
    %v43 = vsel %vm39, %v37, 0.0
    %v44 = vadd.f32 %v42, %v43
    %v45 = vsel %vm39, %v38, 0.0
    %v46 = vadd.f32 %v44, %v45
    %v47 = vrot.slane %v46, 4
    %v48 = vadd.f32 %v46, %v47
    %v49 = vrot.slane %v48, 2
    %v50 = vadd.f32 %v48, %v49
    %v51 = vrot.slane %v50, 1
    %v52 = vadd.f32 %v50, %v51
    %v53 = vsub.f32 12.0, %v52
    %vm54 = vcmask 8192
    %55 = vst.msk [vmem:[#allocation2] sm:$0x1] %vm54, %v53
    // Predicated region
    $region14: #{tpu_custom_call.1} parent=1 // pred_check
      _
    $region15: #{tpu_custom_call.1} parent=1 // pred_check_branch
      %57 = sbr.rel (0) target = $region17
    $region16: #{tpu_custom_call.1} parent=1 // pred_region
      %59 = vsyncadd [#allocation3], 0
      %s61 = sshll.u32 [#allocation2], 4
      %s62 = int_to_ptr.vmem [resolvable:$true] %s61
      %s63 = sshll.u32 %s3, 4
      %s64 = int_to_ptr.hbm [resolvable:$true] %s63
      %66 = dma.vmem_to_hbm [thread:$0]  %s62, 16, %s64, [#allocation3]
    $region17: #{tpu_custom_call.1} parent=1 // pred_fallthru
      _
    // Predicated region
    $region18: #{tpu_custom_call.1} parent=1 // pred_check
      _
    $region19: #{tpu_custom_call.1} parent=1 // pred_check_branch
      %68 = sbr.rel (0) target = $region21
    $region20: #{tpu_custom_call.1} parent=1 // pred_region
      %70 = dma.done [#allocation3], 16
    $region21: #{tpu_custom_call.1} parent=1 // pred_fallthru
      _
    %71 = vsyncpa [#allocation3], 1

</llo_original>
